<compile_context>
chip_gen: v5e
topology: v5e:2x2
jax: 0.10.0
libtpu: 0.0.40
codegen_flags: <defaults>
</compile_context>

<pallas_src>
import functools

import jax
import jax.numpy as jnp
from jax import lax
from jax.experimental import pallas as pl
from jax.experimental.pallas import tpu as pltpu


def _focal_loss_kernel(logits_ref, target_ref, weight_ref, out_ref, *,
                       gamma, reduction, batch_size):
    i = pl.program_id(0)

    logits = logits_ref[...].astype(jnp.float32)          # (C, TB)  class-on-sublane, batch-on-lane
    tgt = target_ref[...]                                  # (1, TB) int32
    w = weight_ref[...].astype(jnp.float32)                # (C, 1)
    C, TB = logits.shape

    # Numerically-stable logsumexp over the (small) class axis = sublane axis.
    m = jnp.max(logits, axis=0, keepdims=True)             # (1, TB)
    e = jnp.exp(logits - m)                                 # (C, TB) -- only per-element exp
    sum_e = jnp.sum(e, axis=0, keepdims=True)               # (1, TB)
    lse = m + jnp.log(sum_e)                                # (1, TB)

    # Bool target mask fused into the two gather-reductions (no float one-hot temporaries).
    class_ids = lax.broadcasted_iota(jnp.int32, (C, TB), 0)
    mask = class_ids == tgt                                 # (C, TB) bool

    neg_inf = jnp.float32(-jnp.inf)
    # Every column has exactly one True (targets in [0, C); padded targets are 0).
    logit_t = jnp.max(jnp.where(mask, logits, neg_inf), axis=0, keepdims=True)   # (1, TB)
    w_t = jnp.sum(jnp.where(mask, w, 0.0), axis=0, keepdims=True)                # (1, TB)

    ce = lse - logit_t                                      # unweighted CE
    weighted_ce = w_t * ce                                  # weighted CE
    pt = jnp.exp(logit_t - lse)                             # == exp(-ce); tiny (1,TB) exp on EUP

    one_minus_pt = 1.0 - pt
    if isinstance(gamma, int) and gamma >= 0:
        modulator = jnp.ones_like(one_minus_pt)
        for _ in range(gamma):                              # unrolled multiplies, no pow
            modulator = modulator * one_minus_pt
    else:
        modulator = one_minus_pt ** jnp.float32(gamma)
    focal = modulator * weighted_ce                         # (1, TB) lane-dense

    if reduction == "none":
        out_ref[...] = focal                                # lane-dense row store
    else:
        # Zero the contribution of padded batch columns, emit an independent per-tile partial.
        col_ids = i * TB + lax.broadcasted_iota(jnp.int32, (1, TB), 1)
        focal = jnp.where(col_ids < batch_size, focal, 0.0)
        partial = jnp.sum(focal, axis=1, keepdims=True)     # (1, 1)
        out_ref[...] = partial.reshape(1, 1, 1)


def _pick_block_cols(B, C, itemsize):
    """Largest multiple-of-128 lane tile keeping one logits tile ~<= 2 MiB in its native dtype."""
    budget_bytes = 2 * 1024 * 1024
    tb = budget_bytes // max(1, C * itemsize)
    tb = max(128, (tb // 128) * 128)
    b_ceil = ((B + 127) // 128) * 128          # do not over-pad tiny batches
    return min(tb, b_ceil)


def focal_loss(predicted, target, weight=None, gamma=2, reduction="mean"):
    """predicted: [B, C] float logits (any float dtype), target: [B] int class indices."""
    B, C = predicted.shape

    # Batch-on-lanes layout plumbing (producers emitting (C, B) natively would skip this).
    logits_t = jnp.transpose(predicted)                          # (C, B), native dtype
    target_row = jnp.asarray(target, jnp.int32).reshape(1, B)    # (1, B)
    if weight is None:
        weight_col = jnp.ones((C, 1), jnp.float32)
    else:
        weight_col = jnp.asarray(weight, jnp.float32).reshape(C, 1)

    itemsize = jnp.dtype(predicted.dtype).itemsize
    tb = _pick_block_cols(B, C, itemsize)
    num_tiles = (B + tb - 1) // tb
    b_pad = num_tiles * tb
    if b_pad != B:
        # Padded columns use logits=0 / target=0 (a valid class) -> no inf/NaN paths; they are
        # sliced off ('none') or masked out in-kernel ('mean'/'sum').
        logits_t = jnp.pad(logits_t, ((0, 0), (0, b_pad - B)))
        target_row = jnp.pad(target_row, ((0, 0), (0, b_pad - B)))

    kernel = functools.partial(_focal_loss_kernel, gamma=gamma,
                               reduction=reduction, batch_size=B)

    in_specs = [
        pl.BlockSpec((C, tb), lambda i: (0, i)),   # logits tile, streamed in native dtype
        pl.BlockSpec((1, tb), lambda i: (0, i)),   # targets tile (lane-dense)
        pl.BlockSpec((C, 1), lambda i: (0, 0)),    # class weights (resident)
    ]

    if reduction == "none":
        out_shape = jax.ShapeDtypeStruct((1, b_pad), jnp.float32)
        out_specs = pl.BlockSpec((1, tb), lambda i: (0, i))          # lane-dense vector output
    else:
        out_shape = jax.ShapeDtypeStruct((num_tiles, 1, 1), jnp.float32)
        out_specs = pl.BlockSpec((1, 1, 1), lambda i: (i, 0, 0))     # per-tile partial sums

    out = pl.pallas_call(
        kernel,
        out_shape=out_shape,
        grid=(num_tiles,),
        in_specs=in_specs,
        out_specs=out_specs,
        compiler_params=pltpu.CompilerParams(
            dimension_semantics=("parallel",),          # tiles fully independent -> megacore
            vmem_limit_bytes=32 * 1024 * 1024,
        ),
    )(logits_t, target_row, weight_col)

    if reduction == "none":
        return out[0, :B]
    total = jnp.sum(out)                                 # finish the reduction in the wrapper
    if reduction == "mean":
        return total / jnp.float32(B)
    return total


def _focal_loss_ref(predicted, target, weight=None, gamma=2, reduction="mean"):
    """Pure-JAX reference mirroring the PyTorch module."""
    predicted = predicted.astype(jnp.float32)
    B, C = predicted.shape
    if weight is None:
        weight = jnp.ones((C,), jnp.float32)
    else:
        weight = jnp.asarray(weight, jnp.float32)
    lse = jax.scipy.special.logsumexp(predicted, axis=-1)
    logit_t = jnp.take_along_axis(predicted, target[:, None], axis=-1)[:, 0]
    ce = lse - logit_t
    weighted_ce = weight[target] * ce
    pt = jnp.exp(-ce)
    focal = (1.0 - pt) ** gamma * weighted_ce
    if reduction == "none":
        return focal
    if reduction == "mean":
        return jnp.mean(focal)
    return jnp.sum(focal)


if __name__ == "__main__":
    key = jax.random.PRNGKey(0)

    cases = [
        # (B, C, dtype, weighted, gamma, reduction)
        (8, 16, jnp.float32, False, 2, "mean"),
        (37, 20, jnp.float32, True, 2, "sum"),     # non-multiple-of-tile batch -> padding path
        (16, 16, jnp.bfloat16, True, 3, "none"),   # bf16 streamed natively, upcast in-kernel
        (12, 24, jnp.float32, False, 2, "none"),
        (260, 16, jnp.float32, True, 2, "mean"),   # multi-tile grid -> parallel partial sums
    ]

    ok = True
    for idx, (B, C, dtype, weighted, gamma, reduction) in enumerate(cases):
        key, k1, k2, k3 = jax.random.split(key, 4)
        predicted = jax.random.normal(k1, (B, C), dtype=jnp.float32).astype(dtype)
        target = jax.random.randint(k2, (B,), 0, C, dtype=jnp.int32)
        weight = (jax.random.uniform(k3, (C,), dtype=jnp.float32) + 0.5) if weighted else None

        out = focal_loss(predicted, target, weight=weight, gamma=gamma, reduction=reduction)
        out = jax.block_until_ready(out)
        ref = _focal_loss_ref(predicted, target, weight=weight, gamma=gamma, reduction=reduction)

        if not jnp.allclose(out, ref, atol=1e-5, rtol=1e-4):
            ok = False
            print(f"case {idx} MISMATCH:", out, ref)

    assert ok
    print("KERNEL_OK")
</pallas_src>

<mosaic_0001>
module attributes {stable_mosaic.version = 11 : i64} {
  func.func @_focal_loss_kernel(%arg0: i32, %arg1: memref<16x128xf32, #tpu.memory_space<vmem>>, %arg2: memref<1x128xi32, #tpu.memory_space<vmem>>, %arg3: memref<16x1xf32, #tpu.memory_space<vmem>>, %arg4: memref<1x1x1xf32, #tpu.memory_space<vmem>>) attributes {dimension_semantics = [#tpu.dimension_semantics<parallel>], iteration_bounds = array<i64: 1>, scalar_prefetch = 0 : i64, scratch_operands = 0 : i64, tpu.core_type = #tpu.core_type<tc>, window_params = [{transform_indices = @transform_0, window_bounds = array<i64: 16, 128>}, {transform_indices = @transform_1, window_bounds = array<i64: 1, 128>}, {pipeline_mode = #tpu.pipeline_mode<synchronous>, transform_indices = @transform_2, window_bounds = array<i64: 16, 1>}, {transform_indices = @transform_3, window_bounds = array<i64: 1, 1, 1>}]} {
    %c0 = arith.constant 0 : index
    %c0_0 = arith.constant 0 : index
    %0 = vector.load %arg1[%c0, %c0_0] : memref<16x128xf32, #tpu.memory_space<vmem>>, vector<16x128xf32>
    %c0_1 = arith.constant 0 : index
    %c0_2 = arith.constant 0 : index
    %1 = vector.load %arg2[%c0_1, %c0_2] : memref<1x128xi32, #tpu.memory_space<vmem>>, vector<1x128xi32>
    %c0_3 = arith.constant 0 : index
    %c0_4 = arith.constant 0 : index
    %2 = vector.load %arg3[%c0_3, %c0_4] : memref<16x1xf32, #tpu.memory_space<vmem>>, vector<16x1xf32>
    %cst = arith.constant dense<0xFF800000> : vector<128xf32>
    %3 = vector.multi_reduction <maximumf>, %0, %cst [0] : vector<16x128xf32> to vector<128xf32>
    %4 = vector.shape_cast %3 : vector<128xf32> to vector<1x128xf32>
    %5 = vector.broadcast %4 : vector<1x128xf32> to vector<16x128xf32>
    %6 = arith.subf %0, %5 : vector<16x128xf32>
    %7 = math.exp %6 : vector<16x128xf32>
    %cst_5 = arith.constant dense<0.000000e+00> : vector<128xf32>
    %8 = vector.multi_reduction <add>, %7, %cst_5 [0] : vector<16x128xf32> to vector<128xf32>
    %9 = vector.shape_cast %8 : vector<128xf32> to vector<1x128xf32>
    %10 = math.log %9 : vector<1x128xf32>
    %11 = arith.addf %4, %10 : vector<1x128xf32>
    %12 = tpu.iota {dimensions = array<i32: 0>} : vector<16x128xi32>
    %13 = vector.broadcast %1 : vector<1x128xi32> to vector<16x128xi32>
    %14 = arith.cmpi eq, %12, %13 : vector<16x128xi32>
    %cst_6 = arith.constant 0xFF800000 : f32
    %15 = vector.broadcast %cst_6 : f32 to vector<16x128xf32>
    %16 = arith.select %14, %0, %15 : vector<16x128xi1>, vector<16x128xf32>
    %cst_7 = arith.constant dense<0xFF800000> : vector<128xf32>
    %17 = vector.multi_reduction <maximumf>, %16, %cst_7 [0] : vector<16x128xf32> to vector<128xf32>
    %18 = vector.shape_cast %17 : vector<128xf32> to vector<1x128xf32>
    %cst_8 = arith.constant 0.000000e+00 : f32
    %19 = vector.shape_cast %2 : vector<16x1xf32> to vector<16x1xf32>
    %20 = vector.broadcast %19 : vector<16x1xf32> to vector<16x128xf32>
    %21 = vector.broadcast %cst_8 : f32 to vector<16x128xf32>
    %22 = arith.select %14, %20, %21 : vector<16x128xi1>, vector<16x128xf32>
    %cst_9 = arith.constant dense<0.000000e+00> : vector<128xf32>
    %23 = vector.multi_reduction <add>, %22, %cst_9 [0] : vector<16x128xf32> to vector<128xf32>
    %24 = vector.shape_cast %23 : vector<128xf32> to vector<1x128xf32>
    %25 = arith.subf %11, %18 : vector<1x128xf32>
    %26 = arith.mulf %24, %25 : vector<1x128xf32>
    %27 = arith.subf %18, %11 : vector<1x128xf32>
    %28 = math.exp %27 : vector<1x128xf32>
    %cst_10 = arith.constant 1.000000e+00 : f32
    %29 = vector.broadcast %cst_10 : f32 to vector<1x128xf32>
    %30 = arith.subf %29, %28 : vector<1x128xf32>
    %cst_11 = arith.constant 1.000000e+00 : f32
    %31 = vector.broadcast %cst_11 : f32 to vector<1x128xf32>
    %32 = arith.mulf %31, %30 : vector<1x128xf32>
    %33 = arith.mulf %32, %30 : vector<1x128xf32>
    %34 = arith.mulf %33, %26 : vector<1x128xf32>
    %c128_i32 = arith.constant 128 : i32
    %35 = arith.muli %arg0, %c128_i32 : i32
    %36 = tpu.iota {dimensions = array<i32: 1>} : vector<1x128xi32>
    %37 = vector.broadcast %35 : i32 to vector<1x128xi32>
    %38 = arith.addi %37, %36 : vector<1x128xi32>
    %c8_i32 = arith.constant 8 : i32
    %39 = vector.broadcast %c8_i32 : i32 to vector<1x128xi32>
    %40 = arith.cmpi slt, %38, %39 : vector<1x128xi32>
    %cst_12 = arith.constant 0.000000e+00 : f32
    %41 = vector.broadcast %cst_12 : f32 to vector<1x128xf32>
    %42 = arith.select %40, %34, %41 : vector<1x128xi1>, vector<1x128xf32>
    %cst_13 = arith.constant dense<0.000000e+00> : vector<1xf32>
    %43 = vector.multi_reduction <add>, %42, %cst_13 [1] : vector<1x128xf32> to vector<1xf32>
    %44 = vector.shape_cast %43 : vector<1xf32> to vector<1x1xf32>
    %45 = vector.shape_cast %44 : vector<1x1xf32> to vector<1x1x1xf32>
    %c0_14 = arith.constant 0 : index
    %c0_15 = arith.constant 0 : index
    %c0_16 = arith.constant 0 : index
    %46 = vector.load %arg4[%c0_14, %c0_15, %c0_16] : memref<1x1x1xf32, #tpu.memory_space<vmem>>, vector<1x1x1xf32>
    tpu.vector_store %arg4[%c0_14, %c0_15, %c0_16], %45 {strides = array<i32>} : memref<1x1x1xf32, #tpu.memory_space<vmem>>, vector<1x1x1xf32>,
    return
  }
  func.func @transform_0(%arg0: i32) -> (i32, i32) {
    %c0_i32 = arith.constant 0 : i32
    %c0_i32_0 = arith.constant 0 : i32
    return %c0_i32, %arg0 : i32, i32
  }
  func.func @transform_1(%arg0: i32) -> (i32, i32) {
    %c0_i32 = arith.constant 0 : i32
    %c0_i32_0 = arith.constant 0 : i32
    return %c0_i32, %arg0 : i32, i32
  }
  func.func @transform_2(%arg0: i32) -> (i32, i32) {
    %c0_i32 = arith.constant 0 : i32
    %c0_i32_0 = arith.constant 0 : i32
    %c0_i32_1 = arith.constant 0 : i32
    return %c0_i32, %c0_i32_0 : i32, i32
  }
  func.func @transform_3(%arg0: i32) -> (i32, i32, i32) {
    %c0_i32 = arith.constant 0 : i32
    %c0_i32_0 = arith.constant 0 : i32
    %c0_i32_1 = arith.constant 0 : i32
    return %arg0, %c0_i32, %c0_i32_0 : i32, i32, i32
  }
}

</mosaic_0001>

<llo_original>
// kernel: tpu_custom_call.1
$region0: #{tpu_custom_call.1}
  #allocation0 [shape = 'u32[]', space=smem, size = 0x4, offset = 0x4, fixed_abs, tag = 'smem constant byte address 0x4 - core index']
  #allocation1 [shape = 'u32[72,128]{1,0:T(1,128)}', space=vmem, size = 0x9000, scoped, tag = 'internal scratch']
  %s0 = inlined_call_operand.vmem [shape: f32[16,128], index: 0, kind: input, shape index: {}]
  %s1 = inlined_call_operand.vmem [shape: s32[1,128], index: 1, kind: input, shape index: {}]
  %s2 = inlined_call_operand.vmem [shape: f32[16,1], index: 2, kind: input, shape index: {}]
  %s3 = inlined_call_operand.hbm [shape: f32[1,1,1], index: 3, kind: output, shape index: {}]
  %s4 = sld [smem:[#allocation0]]
  $region22: #{tpu_custom_call.1} parent=0
    _
  %s6 = ssub.s32 1, %s4
  %s7 = scalar_select 0, %s6, %s4
  $region1: #{tpu_custom_call.1} parent=0
    #allocation2 [shape = 'u8[512]{0}', space=vmem, size = 0x400, scoped, tag = 'output window, operand 0, single buffered']
    #allocation3 [shape = 's32[1]{0}', space=sflag, size = 0x4, scoped, tag = 'scoped memory for tpu_custom_call.1']
    %8 = vsyncpa [#allocation3], 0
    // Predicated region
    $region2: #{tpu_custom_call.1} parent=1 // pred_check
      _
    $region3: #{tpu_custom_call.1} parent=1 // pred_check_branch
      %10 = sbr.rel (0) target = $region5
    $region4: #{tpu_custom_call.1} parent=1 // pred_region
      _
    $region5: #{tpu_custom_call.1} parent=1 // pred_fallthru
      _
    // Predicated region
    $region6: #{tpu_custom_call.1} parent=1 // pred_check
      _
    $region7: #{tpu_custom_call.1} parent=1 // pred_check_branch
      %12 = sbr.rel (0) target = $region9
    $region8: #{tpu_custom_call.1} parent=1 // pred_region
      _
    $region9: #{tpu_custom_call.1} parent=1 // pred_fallthru
      _
    // Predicated region
    $region10: #{tpu_custom_call.1} parent=1 // pred_check
      _
    $region11: #{tpu_custom_call.1} parent=1 // pred_check_branch
      %14 = sbr.rel (0) target = $region13
    $region12: #{tpu_custom_call.1} parent=1 // pred_region
      _
    $region13: #{tpu_custom_call.1} parent=1 // pred_fallthru
      _
    %v15 = vld [vmem:[%s0] sm:$0xff]
    %v16 = vld [vmem:[%s0 + $0x8] sm:$0xff]
    %v17 = vld [vmem:[%s1] sm:$0x1]
    %v18 = vld [vmem:[%s2] sm:$0xff]
    %v19 = vld [vmem:[%s2 + $0x8] sm:$0xff]
    %v20 = vmax.f32 %v15, %v16
    %v21 = vrot.slane %v20, 4
    %v22 = vmax.f32 %v20, %v21
    %v23 = vrot.slane %v22, 2
    %v24 = vmax.f32 %v22, %v23
    %v25 = vrot.slane %v24, 1
    %v26 = vmax.f32 %v24, %v25
    %v27 = vsub.f32 %v15, %v26
    %v28 = vsub.f32 %v16, %v26
    %v29 = vmul.f32 %v27, 1.442695
    %v30 = vpow.pop %v29
    %v31 = vmul.f32 %v28, 1.442695
    %v32 = vpow.pop %v31
    %v33 = vadd.f32 %v30, %v32
    %v34 = vrot.slane %v33, 4
    %v35 = vadd.f32 %v33, %v34
    %v36 = vrot.slane %v35, 2
    %v37 = vadd.f32 %v35, %v36
    %v38 = vrot.slane %v37, 1
    %v39 = vadd.f32 %v37, %v38
    %v40 = vlog2.pop %v39
    %v41 = vmul.f32 %v40, 0.6931472
    %v42 = vadd.f32 %v26, %v41
    %v43 = vlaneseq
    %v44 = vshrl.u32 %v43, 7
    %v45 = vadd.s32 %v44, 8
    %v46 = vperm.slane %v17, 0
    %vm47 = vcmp.eq.s32.totalorder %v44, %v46
    %vm48 = vcmp.eq.s32.totalorder %v45, %v46
    %v49 = vsel %vm47, %v15, -inf
    %v50 = vsel %vm48, %v16, -inf
    %v51 = vmax.f32 %v49, %v50
    %v52 = vrot.slane %v51, 4
    %v53 = vmax.f32 %v51, %v52
    %v54 = vrot.slane %v53, 2
    %v55 = vmax.f32 %v53, %v54
    %v56 = vrot.slane %v55, 1
    %v57 = vmax.f32 %v55, %v56
    %59 = vset.pattern.permute.xlu0 0
    %60 = vperm.xlu0 %59, %v18
    %v61 = vpop.permute.xlu0 %60
    %64 = vset.pattern.permute.xlu0 0
    %65 = vperm.xlu0 %64, %v19
    %v66 = vpop.permute.xlu0 %65
    %v68 = vsel %vm47, %v61, 0.0
    %v69 = vsel %vm48, %v66, 0.0
    %v70 = vadd.f32 %v68, %v69
    %v71 = vrot.slane %v70, 4
    %v72 = vadd.f32 %v70, %v71
    %v73 = vrot.slane %v72, 2
    %v74 = vadd.f32 %v72, %v73
    %v75 = vrot.slane %v74, 1
    %v76 = vadd.f32 %v74, %v75
    %v77 = vsub.f32 %v42, %v57
    %v78 = vmul.f32 %v76, %v77
    %v79 = vsub.f32 %v57, %v42
    %v80 = vmul.f32 %v79, 1.442695
    %v81 = vpow.pop %v80
    %v82 = vsub.f32 1.0, %v81
    %v83 = vmul.f32 %v82, %v82
    %v84 = vmul.f32 %v83, %v78
    %s85 = smul.u32 0, 128
    %v86 = vlaneseq
    %v87 = vand.u32 %v86, 127
    %v88 = vstv %s85
    %v89 = vadd.s32 %v88, %v87
    %vm90 = vcmp.lt.s32.totalorder %v89, 8
    %v91 = vsel %vm90, %v84, 0.0
    %92 = vadd.xlane.f32.xlu0 %v91
    %v93 = vpop.xlane.xlu0 %92
    %vm94 = vcmask 0
    %95 = vst.msk [vmem:[#allocation2] sm:$0x1] %vm94, %v93
    // Predicated region
    $region14: #{tpu_custom_call.1} parent=1 // pred_check
      _
    $region15: #{tpu_custom_call.1} parent=1 // pred_check_branch
      %97 = sbr.rel (0) target = $region17
    $region16: #{tpu_custom_call.1} parent=1 // pred_region
      %99 = vsyncadd [#allocation3], 0
      %s101 = sshll.u32 [#allocation2], 4
      %s102 = int_to_ptr.vmem [resolvable:$true] %s101
      %s103 = sshll.u32 %s3, 4
      %s104 = int_to_ptr.hbm [resolvable:$true] %s103
      %106 = dma.vmem_to_hbm [thread:$0]  %s102, 16, %s104, [#allocation3]
    $region17: #{tpu_custom_call.1} parent=1 // pred_fallthru
      _
    // Predicated region
    $region18: #{tpu_custom_call.1} parent=1 // pred_check
      _
    $region19: #{tpu_custom_call.1} parent=1 // pred_check_branch
      %108 = sbr.rel (0) target = $region21
    $region20: #{tpu_custom_call.1} parent=1 // pred_region
      %110 = dma.done [#allocation3], 16
    $region21: #{tpu_custom_call.1} parent=1 // pred_fallthru
      _
    %111 = vsyncpa [#allocation3], 1

</llo_original>
